<compile_context>
chip_gen: v5e
topology: v5e:2x2
jax: 0.10.0
libtpu: 0.0.40
codegen_flags: <defaults>
</compile_context>

<pallas_src>
import functools

import jax
import jax.numpy as jnp
from jax import lax
from jax.experimental import pallas as pl
from jax.experimental.pallas import tpu as pltpu


def _layernorm_kernel(x_ref, w_ref, b_ref, o_ref, *, eps, inv_n):
    # x_ref:        (B_TILE, R, L)  -- B_TILE whole samples, lane-dense layout
    # w_ref, b_ref: (R, L)          -- per-channel affine pre-broadcast to the
    #                                   per-sample layout (no in-kernel channel math)
    x = x_ref[...].astype(jnp.float32)

    def _sample_sum(t):  # (B, R, L) -> (B, 1, 1), one value per sample
        return jnp.sum(jnp.sum(t, axis=2, keepdims=True), axis=1, keepdims=True)

    # Two-pass (biased) mean/var, matching F.layer_norm numerics.  The divisor is
    # the true per-sample element count C*H*W, NOT the block size, so this is
    # correct for B_TILE > 1 samples per block.
    mu = _sample_sum(x) * inv_n
    xc = x - mu
    var = _sample_sum(xc * xc) * inv_n
    inv_std = lax.rsqrt(var + eps)          # EUP rsqrt, one per sample

    w = w_ref[...].astype(jnp.float32)[None]   # (1, R, L)
    b = b_ref[...].astype(jnp.float32)[None]   # (1, R, L)

    o_ref[...] = (xc * inv_std * w + b).astype(o_ref.dtype)


def _choose_batch_tile(n, sample_bytes, target_bytes):
    """Largest divisor of n whose input block stays under target_bytes, while
    preferring to keep >= 2 grid steps (so v7x's two TensorCores both get work)."""
    best = 1
    for d in range(1, n + 1):
        if n % d:
            continue
        if d * sample_bytes > target_bytes:
            continue
        if n // d < 2 and n > 1:
            continue
        best = d
    return best


def layer_norm(x, weight=None, bias=None, *, eps=1e-5, block_target_bytes=2 << 20):
    """LayerNorm over all non-batch dims of an NCHW tensor.

    x:      (N, C, H, W)
    weight: (C, 1, 1) -- broadcast over (H, W), like the reference PyTorch module
    bias:   (C, 1, 1)
    """
    N, C, H, W = x.shape
    HW = H * W
    M = C * HW  # per-sample element count

    if weight is None:
        weight = jnp.ones((C, 1, 1), dtype=x.dtype)
    if bias is None:
        bias = jnp.zeros((C, 1, 1), dtype=x.dtype)

    # ---- layout: make the last dim lane-dense (multiple of 128) when possible ----
    if M % 128 == 0:
        R, L = M // 128, 128       # fully packed vreg tiles, unmasked stores
    else:
        R, L = C, HW               # fallback: full-dim block (always legal)

    x2 = x.reshape(N, R, L)
    # Pre-broadcast the per-channel affine to the per-sample (R, L) layout once,
    # wrapper-side (pure layout plumbing; only C*H*W elements, shared over N).
    w2 = jnp.broadcast_to(weight.reshape(C, 1), (C, HW)).reshape(R, L)
    b2 = jnp.broadcast_to(bias.reshape(C, 1), (C, HW)).reshape(R, L)

    # ---- batch tiling: ~block_target_bytes per grid step, keep grid >= 2 ----
    itemsize = x.dtype.itemsize
    sample_bytes = M * itemsize
    b_tile = _choose_batch_tile(N, sample_bytes, block_target_bytes)
    grid = (N // b_tile,)

    # ---- VMEM budget: in + out blocks are double-buffered by the pipeline ----
    block_bytes = b_tile * sample_bytes
    param_bytes = 2 * M * jnp.dtype(weight.dtype).itemsize
    vmem_limit = int(min(max(6 * block_bytes + 4 * param_bytes, 32 << 20), 64 << 20))
    # NOTE: samples so large that ~4*sample_bytes exceeds 64 MiB (v7x VMEM) would
    # need an HW-tiled two-pass reduction; not needed at these sizes.

    kernel = functools.partial(_layernorm_kernel, eps=eps, inv_n=1.0 / M)

    cost = pl.CostEstimate(
        flops=7 * N * M,
        transcendentals=N,
        bytes_accessed=2 * N * M * itemsize + 2 * param_bytes,
    )

    out = pl.pallas_call(
        kernel,
        out_shape=jax.ShapeDtypeStruct((N, R, L), x.dtype),
        grid_spec=pltpu.PrefetchScalarGridSpec(
            num_scalar_prefetch=0,
            grid=grid,
            in_specs=[
                pl.BlockSpec((b_tile, R, L), lambda i: (i, 0, 0)),
                pl.BlockSpec((R, L), lambda i: (0, 0)),
                pl.BlockSpec((R, L), lambda i: (0, 0)),
            ],
            out_specs=pl.BlockSpec((b_tile, R, L), lambda i: (i, 0, 0)),
        ),
        compiler_params=pltpu.CompilerParams(
            dimension_semantics=("parallel",),
            vmem_limit_bytes=vmem_limit,
        ),
        cost_estimate=cost,
    )(x2, w2, b2)

    return out.reshape(N, C, H, W)


if __name__ == "__main__":
    key = jax.random.PRNGKey(0)
    N, C, H, W = 2, 4, 16, 16

    x = jax.random.normal(key, (N, C, H, W), dtype=jnp.float32)

    # Parameter init matching nn.Parameter(torch.ones/zeros(n_out, 1, 1)).
    weight = jnp.ones((C, 1, 1), dtype=jnp.float32)
    bias = jnp.zeros((C, 1, 1), dtype=jnp.float32)

    y = layer_norm(x, weight, bias, eps=1e-5)
    jax.block_until_ready(y)

    # Pure-JAX reference (per-sample layer norm with per-channel affine).
    xf = x.reshape(N, -1)
    mu = xf.mean(axis=1, keepdims=True)
    var = ((xf - mu) ** 2).mean(axis=1, keepdims=True)
    xhat = ((xf - mu) / jnp.sqrt(var + 1e-5)).reshape(N, C, H, W)
    ref = xhat * weight[None] + bias[None]
    assert jnp.allclose(y, ref, atol=1e-4, rtol=1e-4)

    # Second check with a non-trivial affine to exercise the pre-broadcast path.
    kw, kb = jax.random.split(jax.random.PRNGKey(1))
    weight2 = jax.random.normal(kw, (C, 1, 1), dtype=jnp.float32)
    bias2 = jax.random.normal(kb, (C, 1, 1), dtype=jnp.float32)
    y2 = layer_norm(x, weight2, bias2, eps=1e-5)
    jax.block_until_ready(y2)
    ref2 = xhat * weight2[None] + bias2[None]
    assert jnp.allclose(y2, ref2, atol=1e-4, rtol=1e-4)

    print("KERNEL_OK")
</pallas_src>

<mosaic_0001>
module attributes {stable_mosaic.version = 11 : i64} {
  func.func @_layernorm_kernel(%arg0: i32, %arg1: memref<1x8x128xf32, #tpu.memory_space<vmem>>, %arg2: memref<8x128xf32, #tpu.memory_space<vmem>>, %arg3: memref<8x128xf32, #tpu.memory_space<vmem>>, %arg4: memref<1x8x128xf32, #tpu.memory_space<vmem>>) attributes {dimension_semantics = [#tpu.dimension_semantics<parallel>], iteration_bounds = array<i64: 2>, scalar_prefetch = 0 : i64, scratch_operands = 0 : i64, tpu.core_type = #tpu.core_type<tc>, window_params = [{transform_indices = @transform_0, window_bounds = array<i64: 1, 8, 128>}, {pipeline_mode = #tpu.pipeline_mode<synchronous>, transform_indices = @transform_1, window_bounds = array<i64: 8, 128>}, {pipeline_mode = #tpu.pipeline_mode<synchronous>, transform_indices = @transform_2, window_bounds = array<i64: 8, 128>}, {transform_indices = @transform_3, window_bounds = array<i64: 1, 8, 128>}]} {
    %c0 = arith.constant 0 : index
    %c0_0 = arith.constant 0 : index
    %c0_1 = arith.constant 0 : index
    %0 = vector.load %arg1[%c0, %c0_0, %c0_1] : memref<1x8x128xf32, #tpu.memory_space<vmem>>, vector<1x8x128xf32>
    %cst = arith.constant dense<0.000000e+00> : vector<1x8xf32>
    %1 = vector.multi_reduction <add>, %0, %cst [2] : vector<1x8x128xf32> to vector<1x8xf32>
    %2 = vector.shape_cast %1 : vector<1x8xf32> to vector<1x8x1xf32>
    %cst_2 = arith.constant dense<0.000000e+00> : vector<1x1xf32>
    %3 = vector.multi_reduction <add>, %2, %cst_2 [1] : vector<1x8x1xf32> to vector<1x1xf32>
    %4 = vector.shape_cast %3 : vector<1x1xf32> to vector<1x1x1xf32>
    %cst_3 = arith.constant 9.765625E-4 : f32
    %5 = vector.broadcast %cst_3 : f32 to vector<1x1x1xf32>
    %6 = arith.mulf %4, %5 : vector<1x1x1xf32>
    %7 = vector.broadcast %6 : vector<1x1x1xf32> to vector<1x8x128xf32>
    %8 = arith.subf %0, %7 : vector<1x8x128xf32>
    %9 = arith.mulf %8, %8 : vector<1x8x128xf32>
    %cst_4 = arith.constant dense<0.000000e+00> : vector<1x8xf32>
    %10 = vector.multi_reduction <add>, %9, %cst_4 [2] : vector<1x8x128xf32> to vector<1x8xf32>
    %11 = vector.shape_cast %10 : vector<1x8xf32> to vector<1x8x1xf32>
    %cst_5 = arith.constant dense<0.000000e+00> : vector<1x1xf32>
    %12 = vector.multi_reduction <add>, %11, %cst_5 [1] : vector<1x8x1xf32> to vector<1x1xf32>
    %13 = vector.shape_cast %12 : vector<1x1xf32> to vector<1x1x1xf32>
    %cst_6 = arith.constant 9.765625E-4 : f32
    %14 = vector.broadcast %cst_6 : f32 to vector<1x1x1xf32>
    %15 = arith.mulf %13, %14 : vector<1x1x1xf32>
    %cst_7 = arith.constant 9.99999974E-6 : f32
    %16 = vector.broadcast %cst_7 : f32 to vector<1x1x1xf32>
    %17 = arith.addf %15, %16 : vector<1x1x1xf32>
    %18 = math.rsqrt %17 : vector<1x1x1xf32>
    %c0_8 = arith.constant 0 : index
    %c0_9 = arith.constant 0 : index
    %19 = vector.load %arg2[%c0_8, %c0_9] : memref<8x128xf32, #tpu.memory_space<vmem>>, vector<8x128xf32>
    %20 = vector.shape_cast %19 : vector<8x128xf32> to vector<1x8x128xf32>
    %c0_10 = arith.constant 0 : index
    %c0_11 = arith.constant 0 : index
    %21 = vector.load %arg3[%c0_10, %c0_11] : memref<8x128xf32, #tpu.memory_space<vmem>>, vector<8x128xf32>
    %22 = vector.shape_cast %21 : vector<8x128xf32> to vector<1x8x128xf32>
    %23 = vector.broadcast %18 : vector<1x1x1xf32> to vector<1x8x128xf32>
    %24 = arith.mulf %8, %23 : vector<1x8x128xf32>
    %25 = arith.mulf %24, %20 : vector<1x8x128xf32>
    %26 = arith.addf %25, %22 : vector<1x8x128xf32>
    %c0_12 = arith.constant 0 : index
    %c0_13 = arith.constant 0 : index
    %c0_14 = arith.constant 0 : index
    %27 = vector.load %arg4[%c0_12, %c0_13, %c0_14] : memref<1x8x128xf32, #tpu.memory_space<vmem>>, vector<1x8x128xf32>
    tpu.vector_store %arg4[%c0_12, %c0_13, %c0_14], %26 {strides = array<i32>} : memref<1x8x128xf32, #tpu.memory_space<vmem>>, vector<1x8x128xf32>,
    return
  }
  func.func @transform_0(%arg0: i32) -> (i32, i32, i32) {
    %c0_i32 = arith.constant 0 : i32
    %c0_i32_0 = arith.constant 0 : i32
    %c0_i32_1 = arith.constant 0 : i32
    return %arg0, %c0_i32, %c0_i32_0 : i32, i32, i32
  }
  func.func @transform_1(%arg0: i32) -> (i32, i32) {
    %c0_i32 = arith.constant 0 : i32
    %c0_i32_0 = arith.constant 0 : i32
    %c0_i32_1 = arith.constant 0 : i32
    return %c0_i32, %c0_i32_0 : i32, i32
  }
  func.func @transform_2(%arg0: i32) -> (i32, i32) {
    %c0_i32 = arith.constant 0 : i32
    %c0_i32_0 = arith.constant 0 : i32
    %c0_i32_1 = arith.constant 0 : i32
    return %c0_i32, %c0_i32_0 : i32, i32
  }
  func.func @transform_3(%arg0: i32) -> (i32, i32, i32) {
    %c0_i32 = arith.constant 0 : i32
    %c0_i32_0 = arith.constant 0 : i32
    %c0_i32_1 = arith.constant 0 : i32
    return %arg0, %c0_i32, %c0_i32_0 : i32, i32, i32
  }
}

</mosaic_0001>

<llo_original>
// kernel: tpu_custom_call.1
$region0: #{tpu_custom_call.1}
  #allocation0 [shape = 'u32[]', space=smem, size = 0x4, offset = 0x4, fixed_abs, tag = 'smem constant byte address 0x4 - core index']
  #allocation1 [shape = 'u32[72,128]{1,0:T(1,128)}', space=vmem, size = 0x9000, scoped, tag = 'internal scratch']
  %s0 = inlined_call_operand.hbm [shape: f32[2,8,128], index: 0, kind: input, shape index: {}]
  %s1 = inlined_call_operand.hbm [shape: f32[8,128], index: 1, kind: input, shape index: {}]
  %s2 = inlined_call_operand.hbm [shape: f32[8,128], index: 2, kind: input, shape index: {}]
  %s3 = inlined_call_operand.hbm [shape: f32[2,8,128], index: 3, kind: output, shape index: {}]
  %s4 = sld [smem:[#allocation0]]
  $region57: #{tpu_custom_call.1} parent=0
    _
  %s6 = ssub.s32 1, %s4
  %s7 = scalar_select 0, %s6, %s4
  $region1: #{tpu_custom_call.1} parent=0
    #allocation2 [shape = 'u8[8192]{0}', space=vmem, size = 0x2000, scoped, tag = 'input window, operand 0']
    #allocation3 [shape = 's32[2]{0}', space=sflag, size = 0x8, scoped, tag = 'scoped memory for tpu_custom_call.1']
    #allocation4 [shape = 's32[2]{0}', space=sflag, size = 0x8, scoped, tag = 'scoped memory for tpu_custom_call.1']
    #allocation5 [shape = 'u8[4096]{0}', space=vmem, size = 0x1000, scoped, tag = 'input window, operand 1, single buffered']
    #allocation6 [shape = 's32[1]{0}', space=sflag, size = 0x4, scoped, tag = 'scoped memory for tpu_custom_call.1']
    #allocation7 [shape = 'u8[4096]{0}', space=vmem, size = 0x1000, scoped, tag = 'input window, operand 2, single buffered']
    #allocation8 [shape = 'u8[8192]{0}', space=vmem, size = 0x2000, scoped, tag = 'output window, operand 0']
    %8 = vsyncpa [#allocation3], 0
    %s9 = scalar_lea.sflag [#allocation3], 1
    %10 = vsyncpa %s9, 0
    %11 = vsyncpa [#allocation6], 0
    %12 = vsyncpa [#allocation4], 0
    %s13 = scalar_lea.sflag [#allocation4], 1
    %14 = vsyncpa %s13, 0
    loop: start=0, step=1, limit=4
    $region2: #{tpu_custom_call.1} parent=1 // loop_pre_header
      _
    $region3: #{tpu_custom_call.1} parent=1 // loop_header
      %s16 = sphi 0, %s20
      %p17 = scmp.ge.s32.totalorder %s16, 4
      %s26 = sphi 0, %s28
      %s29 = sphi 0, %s26
      %s30 = sphi 0, %s29
      %s46 = sphi 0, %s30
      %s50 = sphi 0, %s50
      %s52 = sphi 0, %s50
      %s53 = sphi 0, %s52
      %s67 = sphi 0, %s53
      %s71 = sphi 0, %s71
      %s73 = sphi 0, %s71
      %s74 = sphi 0, %s73
      %s88 = sphi 0, %s74
      %s94 = sphi 0, %s96
      %s97 = sphi 0, %s94
      %s98 = sphi 0, %s97
      %s114 = sphi 0, %s98
    $region4: #{tpu_custom_call.1} parent=1 // loop_header_branch
      %19 = sbr.rel (%p17) target = $region8
    $region5: #{tpu_custom_call.1} parent=1 // loop_body
      %s21 = ssub.s32 %s16, 1
      %s22 = ssub.s32 %s16, 2
      %s23 = sadd.s32 %s16, 1
      %s24 = ssub.s32 %s16, %s23
      %p25 = scmp.eq.s32.totalorder %s24, 0
      %s27 = sadd.s32 %s26, 1
      %s28 = scalar_select %p25, %s26, %s27
      %p31 = pneg %p25
      %p32 = scmp.eq.s32.totalorder %s16, 1
      %p33 = por %p31, %p32
      %p34 = scmp.ne.s32.totalorder %s26, %s29
      %p35 = scmp.eq.s32.totalorder %s16, 0
      %p36 = por %p34, %p35
      %p37 = scmp.ne.s32.totalorder %s26, %s29
      %p38 = scmp.eq.s32.totalorder %s21, 1
      %p39 = por %p37, %p38
      %p40 = scmp.ne.s32.totalorder %s29, %s30
      %p41 = scmp.eq.s32.totalorder %s21, 0
      %p42 = por %p40, %p41
      %p43 = scmp.ne.s32.totalorder %s29, %s30
      %p44 = scmp.eq.s32.totalorder %s22, 1
      %p45 = por %p43, %p44
      %p47 = scmp.ne.s32.totalorder %s30, %s46
      %p48 = scmp.eq.s32.totalorder %s22, 0
      %p49 = por %p47, %p48
      %s51 = sadd.s32 %s50, 1
      %p54 = scmp.eq.s32.totalorder %s16, 1
      %p55 = scmp.ne.s32.totalorder %s50, %s52
      %p56 = scmp.eq.s32.totalorder %s16, 0
      %p57 = por %p55, %p56
      %p58 = scmp.ne.s32.totalorder %s50, %s52
      %p59 = scmp.eq.s32.totalorder %s21, 1
      %p60 = por %p58, %p59
      %p61 = scmp.ne.s32.totalorder %s52, %s53
      %p62 = scmp.eq.s32.totalorder %s21, 0
      %p63 = por %p61, %p62
      %p64 = scmp.ne.s32.totalorder %s52, %s53
      %p65 = scmp.eq.s32.totalorder %s22, 1
      %p66 = por %p64, %p65
      %p68 = scmp.ne.s32.totalorder %s53, %s67
      %p69 = scmp.eq.s32.totalorder %s22, 0
      %p70 = por %p68, %p69
      %s72 = sadd.s32 %s71, 1
      %p75 = scmp.eq.s32.totalorder %s16, 1
      %p76 = scmp.ne.s32.totalorder %s71, %s73
      %p77 = scmp.eq.s32.totalorder %s16, 0
      %p78 = por %p76, %p77
      %p79 = scmp.ne.s32.totalorder %s71, %s73
      %p80 = scmp.eq.s32.totalorder %s21, 1
      %p81 = por %p79, %p80
      %p82 = scmp.ne.s32.totalorder %s73, %s74
      %p83 = scmp.eq.s32.totalorder %s21, 0
      %p84 = por %p82, %p83
      %p85 = scmp.ne.s32.totalorder %s73, %s74
      %p86 = scmp.eq.s32.totalorder %s22, 1
      %p87 = por %p85, %p86
      %p89 = scmp.ne.s32.totalorder %s74, %s88
      %p90 = scmp.eq.s32.totalorder %s22, 0
      %p91 = por %p89, %p90
      %s92 = ssub.s32 %s16, %s23
      %p93 = scmp.eq.s32.totalorder %s92, 0
      %s95 = sadd.s32 %s94, 1
      %s96 = scalar_select %p93, %s94, %s95
      %p99 = pneg %p93
      %p100 = scmp.eq.s32.totalorder %s16, 1
      %p101 = por %p99, %p100
      %p102 = scmp.ne.s32.totalorder %s94, %s97
      %p103 = scmp.eq.s32.totalorder %s16, 0
      %p104 = por %p102, %p103
      %p105 = scmp.ne.s32.totalorder %s94, %s97
      %p106 = scmp.eq.s32.totalorder %s21, 1
      %p107 = por %p105, %p106
      %p108 = scmp.ne.s32.totalorder %s97, %s98
      %p109 = scmp.eq.s32.totalorder %s21, 0
      %p110 = por %p108, %p109
      %p111 = scmp.ne.s32.totalorder %s97, %s98
      %p112 = scmp.eq.s32.totalorder %s22, 1
      %p113 = por %p111, %p112
      %p115 = scmp.ne.s32.totalorder %s98, %s114
      %p116 = scmp.eq.s32.totalorder %s22, 0
      %p117 = por %p115, %p116
      %p118 = scmp.le.s32.totalorder 1, %s16
      %p119 = scmp.lt.s32.totalorder %s16, 3
      %p120 = pnand %p118, %p119
      %p121 = pneg %p120
      // Predicated region
      $region9: #{tpu_custom_call.1} parent=5 // pred_check
        _
      $region10: #{tpu_custom_call.1} parent=5 // pred_check_branch
        %123 = sbr.rel (%p120) target = $region12
      $region11: #{tpu_custom_call.1} parent=5 // pred_region
        %s124 = ssub.s32 %s16, 1
        // Predicated region
        $region13: #{tpu_custom_call.1} parent=11 // pred_check
          %p125 = pneg %p63
        $region14: #{tpu_custom_call.1} parent=11 // pred_check_branch
          %127 = sbr.rel (%p125) target = $region16
        $region15: #{tpu_custom_call.1} parent=11 // pred_region
          %129 = vsyncadd [#allocation6], 0
          %s131 = sshll.u32 %s1, 4
          %s132 = int_to_ptr.hbm [resolvable:$true] %s131
          %s133 = sshll.u32 [#allocation5], 4
          %s134 = int_to_ptr.vmem [resolvable:$true] %s133
          %136 = dma.hbm_to_vmem [thread:$0]  %s132, 128, %s134, [#allocation6]
        $region16: #{tpu_custom_call.1} parent=11 // pred_fallthru
          _
        // Predicated region
        $region17: #{tpu_custom_call.1} parent=11 // pred_check
          %p137 = pneg %p84
        $region18: #{tpu_custom_call.1} parent=11 // pred_check_branch
          %139 = sbr.rel (%p137) target = $region20
        $region19: #{tpu_custom_call.1} parent=11 // pred_region
          %141 = vsyncadd [#allocation6], 0
          %s143 = sshll.u32 %s2, 4
          %s144 = int_to_ptr.hbm [resolvable:$true] %s143
          %s145 = sshll.u32 [#allocation7], 4
          %s146 = int_to_ptr.vmem [resolvable:$true] %s145
          %148 = dma.hbm_to_vmem [thread:$0]  %s144, 128, %s146, [#allocation6]
        $region20: #{tpu_custom_call.1} parent=11 // pred_fallthru
          _
      $region12: #{tpu_custom_call.1} parent=5 // pred_fallthru
        _
      %p149 = scmp.lt.s32.totalorder %s16, 2
      // Predicated region
      $region21: #{tpu_custom_call.1} parent=5 // pred_check
        %p150 = pneg %p149
      $region22: #{tpu_custom_call.1} parent=5 // pred_check_branch
        %152 = sbr.rel (%p150) target = $region24
      $region23: #{tpu_custom_call.1} parent=5 // pred_region
        // Predicated region
        $region25: #{tpu_custom_call.1} parent=23 // pred_check
          %p153 = pneg %p36
        $region26: #{tpu_custom_call.1} parent=23 // pred_check_branch
          %155 = sbr.rel (%p153) target = $region28
        $region27: #{tpu_custom_call.1} parent=23 // pred_region
          %s156 = sand.u32 %s26, 1
          %s157 = scalar_lea.sflag [#allocation3], %s156
          %s158 = sand.u32 %s26, 1
          %s159 = smul.addr %s158, 8
          %s160 = scalar_lea.vmem [#allocation2], %s159
          %162 = vsyncadd %s157, 0
          %s163 = smul.addr %s16, 8
          %s164 = scalar_lea.hbm %s0, %s163
          %s166 = sshll.u32 %s164, 4
          %s167 = int_to_ptr.hbm [resolvable:$true] %s166
          %s168 = sshll.u32 %s160, 4
          %s169 = int_to_ptr.vmem [resolvable:$true] %s168
          %171 = dma.hbm_to_vmem [thread:$0]  %s167, 128, %s169, %s157
        $region28: #{tpu_custom_call.1} parent=23 // pred_fallthru
          _
      $region24: #{tpu_custom_call.1} parent=5 // pred_fallthru
        _
      %p172 = scmp.le.s32.totalorder 1, %s16
      %p173 = scmp.lt.s32.totalorder %s16, 3
      %p174 = pnand %p172, %p173
      %p175 = pneg %p174
      // Predicated region
      $region29: #{tpu_custom_call.1} parent=5 // pred_check
        _
      $region30: #{tpu_custom_call.1} parent=5 // pred_check_branch
        %177 = sbr.rel (%p174) target = $region32
      $region31: #{tpu_custom_call.1} parent=5 // pred_region
        %s178 = ssub.s32 %s16, 1
        %s179 = sand.u32 %s29, 1
        %s180 = scalar_lea.sflag [#allocation3], %s179
        %s181 = sand.u32 %s29, 1
        %s182 = smul.addr %s181, 8
        %s183 = scalar_lea.vmem [#allocation2], %s182
        // Predicated region
        $region33: #{tpu_custom_call.1} parent=31 // pred_check
          %p184 = pneg %p42
        $region34: #{tpu_custom_call.1} parent=31 // pred_check_branch
          %186 = sbr.rel (%p184) target = $region36
        $region35: #{tpu_custom_call.1} parent=31 // pred_region
          %188 = dma.done %s180, 128
        $region36: #{tpu_custom_call.1} parent=31 // pred_fallthru
          _
        // Predicated region
        $region37: #{tpu_custom_call.1} parent=31 // pred_check
          %p189 = pneg %p63
        $region38: #{tpu_custom_call.1} parent=31 // pred_check_branch
          %191 = sbr.rel (%p189) target = $region40
        $region39: #{tpu_custom_call.1} parent=31 // pred_region
          %193 = dma.done [#allocation6], 128
        $region40: #{tpu_custom_call.1} parent=31 // pred_fallthru
          _
        // Predicated region
        $region41: #{tpu_custom_call.1} parent=31 // pred_check
          %p194 = pneg %p84
        $region42: #{tpu_custom_call.1} parent=31 // pred_check_branch
          %196 = sbr.rel (%p194) target = $region44
        $region43: #{tpu_custom_call.1} parent=31 // pred_region
          %198 = dma.done [#allocation6], 128
        $region44: #{tpu_custom_call.1} parent=31 // pred_fallthru
          _
        %s199 = sand.u32 %s29, 1
        %s200 = scalar_lea.sflag [#allocation3], %s199
        %s201 = sand.u32 %s29, 1
        %s202 = smul.addr %s201, 8
        %s203 = scalar_lea.vmem [#allocation2], %s202
        %p204 = pneg %p42
        %p205 = pneg %p39
        %p206 = pneg %p63
        %p207 = pneg %p60
        %p208 = pneg %p84
        %p209 = pneg %p81
        %p210 = pneg %p110
        %p211 = pneg %p107
        %s212 = sand.u32 %s97, 1
        %s213 = scalar_lea.sflag [#allocation4], %s212
        %s214 = sand.u32 %s97, 1
        %s215 = smul.addr %s214, 8
        %s216 = scalar_lea.vmem [#allocation8], %s215
        %v217 = vld [vmem:[%s183] sm:$0xff]
        %218 = vadd.xlane.f32.xlu0 %v217
        %v219 = vpop.xlane.xlu0 %218
        %v220 = vrot.slane %v219, 4
        %v221 = vadd.f32 %v219, %v220
        %v222 = vrot.slane %v221, 2
        %v223 = vadd.f32 %v221, %v222
        %v224 = vrot.slane %v223, 1
        %v225 = vadd.f32 %v223, %v224
        %v226 = vmul.f32 %v225, 0.0009765625
        %v227 = vsub.f32 %v217, %v226
        %v228 = vmul.f32 %v227, %v227
        %229 = vadd.xlane.f32.xlu0 %v228
        %v230 = vpop.xlane.xlu0 %229
        %v231 = vrot.slane %v230, 4
        %v232 = vadd.f32 %v230, %v231
        %v233 = vrot.slane %v232, 2
        %v234 = vadd.f32 %v232, %v233
        %v235 = vrot.slane %v234, 1
        %v236 = vadd.f32 %v234, %v235
        %v237 = vmul.f32 %v236, 0.0009765625
        %v238 = vadd.f32 %v237, 1e-05
        %v239 = vrsqrt.pop %v238
        %v240 = vmul.f32 %v239, %v238
        %v241 = vmul.f32 %v240, %v239
        %v242 = vmul.f32 0.5, %v241
        %v243 = vsub.f32 1.5, %v242
        %v244 = vmul.f32 %v239, %v243
        %vm245 = vweird.f32 %v238
        %vm246 = vweird.f32 %v239
        %vm247 = vmor %vm245, %vm246
        %v248 = vsel %vm247, %v239, %v244
        %v249 = vld [vmem:[#allocation5] sm:$0xff]
        %v250 = vld [vmem:[#allocation7] sm:$0xff]
        %v251 = vmul.f32 %v227, %v248
        %v252 = vmul.f32 %v251, %v249
        %v253 = vadd.f32 %v252, %v250
        %254 = vst [vmem:[%s216] sm:$0xff] %v253
        %s255 = sand.u32 %s97, 1
        %s256 = scalar_lea.sflag [#allocation4], %s255
        %s257 = sand.u32 %s97, 1
        %s258 = smul.addr %s257, 8
        %s259 = scalar_lea.vmem [#allocation8], %s258
        // Predicated region
        $region45: #{tpu_custom_call.1} parent=31 // pred_check
          %p260 = pneg %p107
        $region46: #{tpu_custom_call.1} parent=31 // pred_check_branch
          %262 = sbr.rel (%p260) target = $region48
        $region47: #{tpu_custom_call.1} parent=31 // pred_region
          %264 = vsyncadd %s256, 0
          %s265 = smul.addr %s21, 8
          %s266 = scalar_lea.hbm %s3, %s265
          %s268 = sshll.u32 %s259, 4
          %s269 = int_to_ptr.vmem [resolvable:$true] %s268
          %s270 = sshll.u32 %s266, 4
          %s271 = int_to_ptr.hbm [resolvable:$true] %s270
          %273 = dma.vmem_to_hbm [thread:$0]  %s269, 128, %s271, %s256
        $region48: #{tpu_custom_call.1} parent=31 // pred_fallthru
          _
      $region32: #{tpu_custom_call.1} parent=5 // pred_fallthru
        _
      %p274 = scmp.le.s32.totalorder 2, %s16
      // Predicated region
      $region49: #{tpu_custom_call.1} parent=5 // pred_check
        %p275 = pneg %p274
      $region50: #{tpu_custom_call.1} parent=5 // pred_check_branch
        %277 = sbr.rel (%p275) target = $region52
      $region51: #{tpu_custom_call.1} parent=5 // pred_region
        %s278 = ssub.s32 %s16, 2
        // Predicated region
        $region53: #{tpu_custom_call.1} parent=51 // pred_check
          %p279 = pneg %p113
        $region54: #{tpu_custom_call.1} parent=51 // pred_check_branch
          %281 = sbr.rel (%p279) target = $region56
        $region55: #{tpu_custom_call.1} parent=51 // pred_region
          %s282 = sand.u32 %s98, 1
          %s283 = scalar_lea.sflag [#allocation4], %s282
          %s284 = sand.u32 %s98, 1
          %s285 = smul.addr %s284, 8
          %s286 = scalar_lea.vmem [#allocation8], %s285
          %288 = dma.done %s283, 128
        $region56: #{tpu_custom_call.1} parent=51 // pred_fallthru
          _
      $region52: #{tpu_custom_call.1} parent=5 // pred_fallthru
        _
    $region6: #{tpu_custom_call.1} parent=1 // loop_footer
      %s20 = sadd.s32 1, %s16
    $region7: #{tpu_custom_call.1} parent=1 // loop_footer_branch
      %15 = sbr.rel target = $region3
    $region8: #{tpu_custom_call.1} parent=1 // loop_exit
      _
    %289 = vsyncpa [#allocation3], 1
    %s290 = scalar_lea.sflag [#allocation3], 1
    %291 = vsyncpa %s290, 1
    %292 = vsyncpa [#allocation6], 1
    %293 = vsyncpa [#allocation4], 1
    %s294 = scalar_lea.sflag [#allocation4], 1
    %295 = vsyncpa %s294, 1

</llo_original>
